<compile_context>
chip_gen: v7x
topology: tpu7x:2x2x1
jax: 0.10.0
libtpu: 0.0.40
codegen_flags: <defaults>
</compile_context>

<pallas_src>
import functools

import jax
import jax.numpy as jnp
from jax.experimental import pallas as pl
from jax.experimental.pallas import tpu as pltpu


def _round_up(x, m):
    return ((x + m - 1) // m) * m


def _critic_kernel(s_ref, a_ref,
                   w1_ref, b1_ref,
                   w2s_ref, w2a_ref, b2_ref,
                   w3_ref, b3_ref,
                   out_ref,
                   *, log):
    mxu_dtype = w1_ref.dtype  # bf16 weights; f32 accumulation below

    s = s_ref[...].astype(mxu_dtype)
    a = a_ref[...].astype(mxu_dtype)

    # fc1 + relu (f32 accumulate, f32 epilogue)
    h1 = jnp.dot(s, w1_ref[...], preferred_element_type=jnp.float32)
    h1 = jnp.maximum(h1 + b1_ref[...], 0.0)

    # fc2 over cat([h1, actions]) + relu, split into two matmuls
    h2 = (jnp.dot(h1.astype(mxu_dtype), w2s_ref[...],
                  preferred_element_type=jnp.float32)
          + jnp.dot(a, w2a_ref[...], preferred_element_type=jnp.float32)
          + b2_ref[...])
    h2 = jnp.maximum(h2, 0.0)

    # fc3 logits at the exact (unpadded) num_atoms width
    logits = (jnp.dot(h2.astype(mxu_dtype), w3_ref[...],
                      preferred_element_type=jnp.float32)
              + b3_ref[...])

    # numerically stable softmax / log_softmax over the last axis
    m = jnp.max(logits, axis=-1, keepdims=True)
    shifted = logits - m
    e = jnp.exp(shifted)
    denom = jnp.sum(e, axis=-1, keepdims=True)
    if log:
        out_ref[...] = (shifted - jnp.log(denom)).astype(out_ref.dtype)
    else:
        # Exact divide (not approx reciprocal): rows sum to 1 to f32 precision,
        # and the VPU divide is free in this memory-bound kernel.
        out_ref[...] = (e / denom).astype(out_ref.dtype)


def init_critic_params(key, actions_size, states_size, hidden_in_size,
                       hidden_out_size, num_atoms, low=-0.03, high=0.03):
    """Deterministic uniform(-0.03, 0.03) init, mirroring initialize_weights."""
    ks = jax.random.split(key, 6)
    u = lambda k, shape: jax.random.uniform(k, shape, jnp.float32, low, high)
    return {
        "w1": u(ks[0], (states_size, hidden_in_size)),
        "b1": u(ks[1], (1, hidden_in_size)),
        "w2": u(ks[2], (hidden_in_size + actions_size, hidden_out_size)),
        "b2": u(ks[3], (1, hidden_out_size)),
        "w3": u(ks[4], (hidden_out_size, num_atoms)),
        "b3": u(ks[5], (1, num_atoms)),
    }


def prepare_critic_params(params, mxu_dtype=jnp.bfloat16):
    """One-time prep: split W2 rows at hidden_in, cast MXU inputs to bf16.

    Biases stay f32 (they are added to the f32 accumulators in-kernel).
    """
    hidden_in = params["w1"].shape[1]
    return {
        "w1": params["w1"].astype(mxu_dtype),
        "b1": params["b1"].astype(jnp.float32),
        "w2s": params["w2"][:hidden_in, :].astype(mxu_dtype),
        "w2a": params["w2"][hidden_in:, :].astype(mxu_dtype),
        "b2": params["b2"].astype(jnp.float32),
        "w3": params["w3"].astype(mxu_dtype),
        "b3": params["b3"].astype(jnp.float32),
    }


def critic_forward(states, actions, prep, log=False, tm=1024,
                   out_dtype=jnp.float32):
    """Pallas implementation of Critic.forward on prepared params.

    `states` / `actions` may be f32 or bf16 (they are cast to the MXU dtype
    inside the kernel either way); `out_dtype=jnp.bfloat16` halves the output
    writeback for consumers that tolerate it.
    """
    w1, b1 = prep["w1"], prep["b1"]
    w2s, w2a, b2 = prep["w2s"], prep["w2a"], prep["b2"]
    w3, b3 = prep["w3"], prep["b3"]

    B, S = states.shape
    A = actions.shape[1]
    H1 = w1.shape[1]
    H2 = w2s.shape[1]
    N = w3.shape[1]

    # Batch tile: large (mem/overhead-bound), multiple of 8 sublanes, never
    # larger than needed, and split into >= 2 grid steps whenever B allows it
    # so both v7x TensorCores get work (single-TC v5e/v6e unaffected).
    tm = _round_up(min(tm, B), 8)
    tm = min(tm, _round_up((B + 1) // 2, 8))
    tm = max(tm, 8)
    grid = (pl.cdiv(B, tm),)

    def row_spec(cols):
        # Streamed per-batch-tile block (auto double-buffered DMA).
        return pl.BlockSpec((tm, cols), lambda i: (i, 0))

    def resident_spec(rows, cols):
        # Constant index_map -> weight block stays VMEM-resident across the
        # grid.  (Single-buffering via pipeline_mode=pl.Buffered(1) would save
        # a few tens of KiB of VMEM but is deliberately skipped: weights total
        # ~35 KiB and the default lowers cleanly everywhere.)
        return pl.BlockSpec((rows, cols), lambda i: (0, 0))

    weight_bytes = sum(int(x.size) * x.dtype.itemsize
                       for x in (w1, b1, w2s, w2a, b2, w3, b3))
    cost = pl.CostEstimate(
        flops=2 * B * (S * H1 + (H1 + A) * H2 + H2 * N),
        transcendentals=B * N,
        bytes_accessed=(int(states.size) * states.dtype.itemsize
                        + int(actions.size) * actions.dtype.itemsize
                        + weight_bytes
                        + B * N * jnp.dtype(out_dtype).itemsize),
    )

    return pl.pallas_call(
        functools.partial(_critic_kernel, log=log),
        out_shape=jax.ShapeDtypeStruct((B, N), out_dtype),
        grid=grid,
        in_specs=[
            row_spec(S),             # states  (streamed)
            row_spec(A),             # actions (streamed)
            resident_spec(S, H1),    # w1
            resident_spec(1, H1),    # b1
            resident_spec(H1, H2),   # w2 rows acting on h1
            resident_spec(A, H2),    # w2 rows acting on actions
            resident_spec(1, H2),    # b2
            resident_spec(H2, N),    # w3
            resident_spec(1, N),     # b3
        ],
        # Output block last dim == full array dim (num_atoms): legal BlockSpec,
        # no lane padding, no post-kernel slice, 4x fewer writeback bytes.
        out_specs=pl.BlockSpec((tm, N), lambda i: (i, 0)),
        compiler_params=pltpu.CompilerParams(
            dimension_semantics=("parallel",)),
        cost_estimate=cost,
    )(states, actions, w1, b1, w2s, w2a, b2, w3, b3)


def _reference_forward_f32(states, actions, params, log=False):
    # Pure-f32 JAX reference, identical math to the PyTorch module.
    s = states.astype(jnp.float32)
    a = actions.astype(jnp.float32)
    h1 = jnp.maximum(s @ params["w1"] + params["b1"], 0.0)
    cat = jnp.concatenate([h1, a], axis=1)
    h2 = jnp.maximum(cat @ params["w2"] + params["b2"], 0.0)
    logits = h2 @ params["w3"] + params["b3"]
    return jax.nn.log_softmax(logits, -1) if log else jax.nn.softmax(logits, -1)


def _reference_forward_prepared(states, actions, prep, log=False):
    # Mirrors the kernel's bf16-input / f32-accumulate math for a tight check.
    dt = prep["w1"].dtype
    s = states.astype(dt)
    a = actions.astype(dt)
    h1 = jnp.maximum(
        jnp.dot(s, prep["w1"], preferred_element_type=jnp.float32) + prep["b1"], 0.0)
    h2 = jnp.maximum(
        jnp.dot(h1.astype(dt), prep["w2s"], preferred_element_type=jnp.float32)
        + jnp.dot(a, prep["w2a"], preferred_element_type=jnp.float32)
        + prep["b2"], 0.0)
    logits = (jnp.dot(h2.astype(dt), prep["w3"],
                      preferred_element_type=jnp.float32) + prep["b3"])
    return jax.nn.log_softmax(logits, -1) if log else jax.nn.softmax(logits, -1)


if __name__ == "__main__":
    # small, module-consistent sizes
    batch = 8
    actions_size = 16
    states_size = 32
    hidden_in_size = 64
    hidden_out_size = 64
    num_atoms = 32

    key = jax.random.PRNGKey(0)
    k_params, k_s, k_a = jax.random.split(key, 3)

    params = init_critic_params(k_params, actions_size, states_size,
                                hidden_in_size, hidden_out_size, num_atoms)
    prep = prepare_critic_params(params)

    states = jax.random.normal(k_s, (batch, states_size), jnp.float32)
    actions = jax.random.normal(k_a, (batch, actions_size), jnp.float32)

    # softmax branch (f32 in / f32 out)
    out = jax.block_until_ready(critic_forward(states, actions, prep, log=False))
    assert out.shape == (batch, num_atoms) and out.dtype == jnp.float32
    ref_bf = _reference_forward_prepared(states, actions, prep, log=False)
    ref_f32 = _reference_forward_f32(states, actions, params, log=False)
    assert jnp.allclose(out, ref_bf, atol=1e-3, rtol=1e-2)    # same bf16 math
    assert jnp.allclose(out, ref_f32, atol=5e-3, rtol=1e-2)   # module semantics
    # exact-divide softmax: rows normalized to f32 precision
    assert jnp.allclose(jnp.sum(out, axis=-1), 1.0, atol=1e-5)

    # log_softmax branch
    out_log = jax.block_until_ready(critic_forward(states, actions, prep, log=True))
    ref_bf_log = _reference_forward_prepared(states, actions, prep, log=True)
    ref_f32_log = _reference_forward_f32(states, actions, params, log=True)
    assert jnp.allclose(out_log, ref_bf_log, atol=1e-3, rtol=1e-2)
    assert jnp.allclose(out_log, ref_f32_log, atol=5e-3, rtol=1e-2)

    # bf16-in / bf16-out variant: halves both the input DMA and the writeback.
    s16 = states.astype(jnp.bfloat16)
    a16 = actions.astype(jnp.bfloat16)
    out16 = jax.block_until_ready(
        critic_forward(s16, a16, prep, log=False, out_dtype=jnp.bfloat16))
    assert out16.shape == (batch, num_atoms) and out16.dtype == jnp.bfloat16
    assert jnp.allclose(out16.astype(jnp.float32), out, atol=2e-2, rtol=5e-2)

    print("KERNEL_OK")
</pallas_src>

<mosaic_0001>
module attributes {stable_mosaic.version = 11 : i64} {
  func.func @_critic_kernel(%arg0: i32, %arg1: memref<8x32xf32, #tpu.memory_space<vmem>>, %arg2: memref<8x16xf32, #tpu.memory_space<vmem>>, %arg3: memref<32x64xbf16, #tpu.memory_space<vmem>>, %arg4: memref<1x64xf32, #tpu.memory_space<vmem>>, %arg5: memref<64x64xbf16, #tpu.memory_space<vmem>>, %arg6: memref<16x64xbf16, #tpu.memory_space<vmem>>, %arg7: memref<1x64xf32, #tpu.memory_space<vmem>>, %arg8: memref<64x32xbf16, #tpu.memory_space<vmem>>, %arg9: memref<1x32xf32, #tpu.memory_space<vmem>>, %arg10: memref<8x32xf32, #tpu.memory_space<vmem>>) attributes {dimension_semantics = [#tpu.dimension_semantics<parallel>], iteration_bounds = array<i64: 1>, scalar_prefetch = 0 : i64, scratch_operands = 0 : i64, tpu.core_type = #tpu.core_type<tc>, window_params = [{transform_indices = @transform_0, window_bounds = array<i64: 8, 32>}, {transform_indices = @transform_1, window_bounds = array<i64: 8, 16>}, {pipeline_mode = #tpu.pipeline_mode<synchronous>, transform_indices = @transform_2, window_bounds = array<i64: 32, 64>}, {pipeline_mode = #tpu.pipeline_mode<synchronous>, transform_indices = @transform_3, window_bounds = array<i64: 1, 64>}, {pipeline_mode = #tpu.pipeline_mode<synchronous>, transform_indices = @transform_4, window_bounds = array<i64: 64, 64>}, {pipeline_mode = #tpu.pipeline_mode<synchronous>, transform_indices = @transform_5, window_bounds = array<i64: 16, 64>}, {pipeline_mode = #tpu.pipeline_mode<synchronous>, transform_indices = @transform_6, window_bounds = array<i64: 1, 64>}, {pipeline_mode = #tpu.pipeline_mode<synchronous>, transform_indices = @transform_7, window_bounds = array<i64: 64, 32>}, {pipeline_mode = #tpu.pipeline_mode<synchronous>, transform_indices = @transform_8, window_bounds = array<i64: 1, 32>}, {transform_indices = @transform_9, window_bounds = array<i64: 8, 32>}]} {
    %c0 = arith.constant 0 : index
    %c0_0 = arith.constant 0 : index
    %0 = vector.load %arg1[%c0, %c0_0] : memref<8x32xf32, #tpu.memory_space<vmem>>, vector<8x32xf32>
    %1 = arith.truncf %0 : vector<8x32xf32> to vector<8x32xbf16>
    %c0_1 = arith.constant 0 : index
    %c0_2 = arith.constant 0 : index
    %2 = vector.load %arg2[%c0_1, %c0_2] : memref<8x16xf32, #tpu.memory_space<vmem>>, vector<8x16xf32>
    %3 = arith.truncf %2 : vector<8x16xf32> to vector<8x16xbf16>
    %c0_3 = arith.constant 0 : index
    %c0_4 = arith.constant 0 : index
    %4 = vector.load %arg3[%c0_3, %c0_4] : memref<32x64xbf16, #tpu.memory_space<vmem>>, vector<32x64xbf16>
    %cst = arith.constant dense<0.000000e+00> : vector<8x64xf32>
    %5 = tpu.matmul %1, %4, %cst {dimension_numbers = #tpu.dot_dimension_numbers<[1], [0], [0], [1], [0, 0, 1, 1], [], []>} : vector<8x32xbf16>, vector<32x64xbf16>, vector<8x64xf32> -> vector<8x64xf32>
    %c0_5 = arith.constant 0 : index
    %c0_6 = arith.constant 0 : index
    %6 = vector.load %arg4[%c0_5, %c0_6] : memref<1x64xf32, #tpu.memory_space<vmem>>, vector<1x64xf32>
    %7 = vector.broadcast %6 : vector<1x64xf32> to vector<8x64xf32>
    %8 = arith.addf %5, %7 : vector<8x64xf32>
    %cst_7 = arith.constant 0.000000e+00 : f32
    %9 = vector.broadcast %cst_7 : f32 to vector<8x64xf32>
    %10 = arith.maximumf %8, %9 : vector<8x64xf32>
    %11 = arith.truncf %10 : vector<8x64xf32> to vector<8x64xbf16>
    %c0_8 = arith.constant 0 : index
    %c0_9 = arith.constant 0 : index
    %12 = vector.load %arg5[%c0_8, %c0_9] : memref<64x64xbf16, #tpu.memory_space<vmem>>, vector<64x64xbf16>
    %cst_10 = arith.constant dense<0.000000e+00> : vector<8x64xf32>
    %13 = tpu.matmul %11, %12, %cst_10 {dimension_numbers = #tpu.dot_dimension_numbers<[1], [0], [0], [1], [0, 0, 1, 1], [], []>} : vector<8x64xbf16>, vector<64x64xbf16>, vector<8x64xf32> -> vector<8x64xf32>
    %c0_11 = arith.constant 0 : index
    %c0_12 = arith.constant 0 : index
    %14 = vector.load %arg6[%c0_11, %c0_12] : memref<16x64xbf16, #tpu.memory_space<vmem>>, vector<16x64xbf16>
    %cst_13 = arith.constant dense<0.000000e+00> : vector<8x64xf32>
    %15 = tpu.matmul %3, %14, %cst_13 {dimension_numbers = #tpu.dot_dimension_numbers<[1], [0], [0], [1], [0, 0, 1, 1], [], []>} : vector<8x16xbf16>, vector<16x64xbf16>, vector<8x64xf32> -> vector<8x64xf32>
    %16 = arith.addf %13, %15 : vector<8x64xf32>
    %c0_14 = arith.constant 0 : index
    %c0_15 = arith.constant 0 : index
    %17 = vector.load %arg7[%c0_14, %c0_15] : memref<1x64xf32, #tpu.memory_space<vmem>>, vector<1x64xf32>
    %18 = vector.broadcast %17 : vector<1x64xf32> to vector<8x64xf32>
    %19 = arith.addf %16, %18 : vector<8x64xf32>
    %cst_16 = arith.constant 0.000000e+00 : f32
    %20 = vector.broadcast %cst_16 : f32 to vector<8x64xf32>
    %21 = arith.maximumf %19, %20 : vector<8x64xf32>
    %22 = arith.truncf %21 : vector<8x64xf32> to vector<8x64xbf16>
    %c0_17 = arith.constant 0 : index
    %c0_18 = arith.constant 0 : index
    %23 = vector.load %arg8[%c0_17, %c0_18] : memref<64x32xbf16, #tpu.memory_space<vmem>>, vector<64x32xbf16>
    %cst_19 = arith.constant dense<0.000000e+00> : vector<8x32xf32>
    %24 = tpu.matmul %22, %23, %cst_19 {dimension_numbers = #tpu.dot_dimension_numbers<[1], [0], [0], [1], [0, 0, 1, 1], [], []>} : vector<8x64xbf16>, vector<64x32xbf16>, vector<8x32xf32> -> vector<8x32xf32>
    %c0_20 = arith.constant 0 : index
    %c0_21 = arith.constant 0 : index
    %25 = vector.load %arg9[%c0_20, %c0_21] : memref<1x32xf32, #tpu.memory_space<vmem>>, vector<1x32xf32>
    %26 = vector.broadcast %25 : vector<1x32xf32> to vector<8x32xf32>
    %27 = arith.addf %24, %26 : vector<8x32xf32>
    %cst_22 = arith.constant dense<0xFF800000> : vector<8xf32>
    %28 = vector.multi_reduction <maximumf>, %27, %cst_22 [1] : vector<8x32xf32> to vector<8xf32>
    %29 = vector.shape_cast %28 : vector<8xf32> to vector<8x1xf32>
    %30 = vector.broadcast %29 : vector<8x1xf32> to vector<8x32xf32>
    %31 = arith.subf %27, %30 : vector<8x32xf32>
    %32 = math.exp %31 : vector<8x32xf32>
    %cst_23 = arith.constant dense<0.000000e+00> : vector<8xf32>
    %33 = vector.multi_reduction <add>, %32, %cst_23 [1] : vector<8x32xf32> to vector<8xf32>
    %34 = vector.shape_cast %33 : vector<8xf32> to vector<8x1xf32>
    %35 = vector.broadcast %34 : vector<8x1xf32> to vector<8x32xf32>
    %36 = arith.divf %32, %35 : vector<8x32xf32>
    %c0_24 = arith.constant 0 : index
    %c0_25 = arith.constant 0 : index
    %37 = vector.load %arg10[%c0_24, %c0_25] : memref<8x32xf32, #tpu.memory_space<vmem>>, vector<8x32xf32>
    tpu.vector_store %arg10[%c0_24, %c0_25], %36 {strides = array<i32>} : memref<8x32xf32, #tpu.memory_space<vmem>>, vector<8x32xf32>,
    return
  }
  func.func @transform_0(%arg0: i32) -> (i32, i32) {
    %c0_i32 = arith.constant 0 : i32
    %c0_i32_0 = arith.constant 0 : i32
    return %arg0, %c0_i32 : i32, i32
  }
  func.func @transform_1(%arg0: i32) -> (i32, i32) {
    %c0_i32 = arith.constant 0 : i32
    %c0_i32_0 = arith.constant 0 : i32
    return %arg0, %c0_i32 : i32, i32
  }
  func.func @transform_2(%arg0: i32) -> (i32, i32) {
    %c0_i32 = arith.constant 0 : i32
    %c0_i32_0 = arith.constant 0 : i32
    %c0_i32_1 = arith.constant 0 : i32
    return %c0_i32, %c0_i32_0 : i32, i32
  }
  func.func @transform_3(%arg0: i32) -> (i32, i32) {
    %c0_i32 = arith.constant 0 : i32
    %c0_i32_0 = arith.constant 0 : i32
    %c0_i32_1 = arith.constant 0 : i32
    return %c0_i32, %c0_i32_0 : i32, i32
  }
  func.func @transform_4(%arg0: i32) -> (i32, i32) {
    %c0_i32 = arith.constant 0 : i32
    %c0_i32_0 = arith.constant 0 : i32
    %c0_i32_1 = arith.constant 0 : i32
    return %c0_i32, %c0_i32_0 : i32, i32
  }
  func.func @transform_5(%arg0: i32) -> (i32, i32) {
    %c0_i32 = arith.constant 0 : i32
    %c0_i32_0 = arith.constant 0 : i32
    %c0_i32_1 = arith.constant 0 : i32
    return %c0_i32, %c0_i32_0 : i32, i32
  }
  func.func @transform_6(%arg0: i32) -> (i32, i32) {
    %c0_i32 = arith.constant 0 : i32
    %c0_i32_0 = arith.constant 0 : i32
    %c0_i32_1 = arith.constant 0 : i32
    return %c0_i32, %c0_i32_0 : i32, i32
  }
  func.func @transform_7(%arg0: i32) -> (i32, i32) {
    %c0_i32 = arith.constant 0 : i32
    %c0_i32_0 = arith.constant 0 : i32
    %c0_i32_1 = arith.constant 0 : i32
    return %c0_i32, %c0_i32_0 : i32, i32
  }
  func.func @transform_8(%arg0: i32) -> (i32, i32) {
    %c0_i32 = arith.constant 0 : i32
    %c0_i32_0 = arith.constant 0 : i32
    %c0_i32_1 = arith.constant 0 : i32
    return %c0_i32, %c0_i32_0 : i32, i32
  }
  func.func @transform_9(%arg0: i32) -> (i32, i32) {
    %c0_i32 = arith.constant 0 : i32
    %c0_i32_0 = arith.constant 0 : i32
    return %arg0, %c0_i32 : i32, i32
  }
}

</mosaic_0001>

<llo_original>
// kernel: tpu_custom_call.1
$region0: #{tpu_custom_call.1}
  #allocation0 [shape = 'u32[]', space=smem, size = 0x4, offset = 0x4, fixed_abs, tag = 'smem constant byte address 0x4 - core index']
  #allocation1 [shape = 'u32[144,128]{1,0:T(1,128)}', space=vmem, size = 0x12000, scoped, tag = 'internal scratch']
  %s0 = inlined_call_operand.vmem [shape: f32[8,32], index: 0, kind: input, shape index: {}]
  %s1 = inlined_call_operand.hbm [shape: f32[8,16], index: 1, kind: input, shape index: {}]
  %s2 = inlined_call_operand.vmem [shape: bf16[32,64], index: 2, kind: input, shape index: {}]
  %s3 = inlined_call_operand.vmem [shape: f32[1,64], index: 3, kind: input, shape index: {}]
  %s4 = inlined_call_operand.vmem [shape: bf16[64,64], index: 4, kind: input, shape index: {}]
  %s5 = inlined_call_operand.hbm [shape: bf16[16,64], index: 5, kind: input, shape index: {}]
  %s6 = inlined_call_operand.vmem [shape: f32[1,64], index: 6, kind: input, shape index: {}]
  %s7 = inlined_call_operand.vmem [shape: bf16[64,32], index: 7, kind: input, shape index: {}]
  %s8 = inlined_call_operand.vmem [shape: f32[1,32], index: 8, kind: input, shape index: {}]
  %s9 = inlined_call_operand.hbm [shape: f32[8,32], index: 9, kind: output, shape index: {}]
  %s10 = sld [smem:[#allocation0]]
  $region54: #{tpu_custom_call.1} parent=0
    _
  %s12 = ssub.s32 1, %s10
  %s13 = scalar_select 0, %s12, %s10
  $region1: #{tpu_custom_call.1} parent=0
    #allocation2 [shape = 'u8[4096]{0}', space=vmem, size = 0x1000, scoped, tag = 'input window, operand 1, single buffered']
    #allocation3 [shape = 's32[1]{0}', space=sflag, size = 0x4, scoped, tag = 'scoped memory for tpu_custom_call.1']
    #allocation4 [shape = 's32[1]{0}', space=sflag, size = 0x4, scoped, tag = 'scoped memory for tpu_custom_call.1']
    #allocation5 [shape = 'u8[4096]{0}', space=vmem, size = 0x1000, scoped, tag = 'input window, operand 5, single buffered']
    #allocation6 [shape = 's32[1]{0}', space=sflag, size = 0x4, scoped, tag = 'scoped memory for tpu_custom_call.1']
    #allocation7 [shape = 'u8[4096]{0}', space=vmem, size = 0x1000, scoped, tag = 'output window, operand 0, single buffered']
    %14 = vsyncpa [#allocation3], 0
    %15 = vsyncpa [#allocation6], 0
    %16 = vsyncpa [#allocation4], 0
    // Predicated region
    $region2: #{tpu_custom_call.1} parent=1 // pred_check
      _
    $region3: #{tpu_custom_call.1} parent=1 // pred_check_branch
      %18 = sbr.rel (0) target = $region5
    $region4: #{tpu_custom_call.1} parent=1 // pred_region
      _
    $region5: #{tpu_custom_call.1} parent=1 // pred_fallthru
      _
    // Predicated region
    $region6: #{tpu_custom_call.1} parent=1 // pred_check
      _
    $region7: #{tpu_custom_call.1} parent=1 // pred_check_branch
      %20 = sbr.rel (0) target = $region9
    $region8: #{tpu_custom_call.1} parent=1 // pred_region
      %s22 = ssub.s32 128, 128
      %23 = vsyncadd [#allocation3], %s22
      %s25 = sshll.u32 [#allocation2], 4
      %s26 = int_to_ptr.vmem [resolvable:$true] %s25
      %28 = dma.hbm_to_vmem [thread:$0]  %s1, 128, %s26, [#allocation3]
    $region9: #{tpu_custom_call.1} parent=1 // pred_fallthru
      _
    // Predicated region
    $region10: #{tpu_custom_call.1} parent=1 // pred_check
      _
    $region11: #{tpu_custom_call.1} parent=1 // pred_check_branch
      %30 = sbr.rel (0) target = $region13
    $region12: #{tpu_custom_call.1} parent=1 // pred_region
      _
    $region13: #{tpu_custom_call.1} parent=1 // pred_fallthru
      _
    // Predicated region
    $region14: #{tpu_custom_call.1} parent=1 // pred_check
      _
    $region15: #{tpu_custom_call.1} parent=1 // pred_check_branch
      %32 = sbr.rel (0) target = $region17
    $region16: #{tpu_custom_call.1} parent=1 // pred_region
      _
    $region17: #{tpu_custom_call.1} parent=1 // pred_fallthru
      _
    // Predicated region
    $region18: #{tpu_custom_call.1} parent=1 // pred_check
      _
    $region19: #{tpu_custom_call.1} parent=1 // pred_check_branch
      %34 = sbr.rel (0) target = $region21
    $region20: #{tpu_custom_call.1} parent=1 // pred_region
      _
    $region21: #{tpu_custom_call.1} parent=1 // pred_fallthru
      _
    // Predicated region
    $region22: #{tpu_custom_call.1} parent=1 // pred_check
      _
    $region23: #{tpu_custom_call.1} parent=1 // pred_check_branch
      %36 = sbr.rel (0) target = $region25
    $region24: #{tpu_custom_call.1} parent=1 // pred_region
      %s38 = ssub.s32 128, 128
      %39 = vsyncadd [#allocation6], %s38
      %s40 = sshll.u32 [#allocation5], 4
      %s41 = int_to_ptr.vmem [resolvable:$true] %s40
      %46 = dma.hbm_to_vmem [thread:$0]  %s5, 128, %s41, [#allocation6], 64, 64, 4
    $region25: #{tpu_custom_call.1} parent=1 // pred_fallthru
      _
    // Predicated region
    $region26: #{tpu_custom_call.1} parent=1 // pred_check
      _
    $region27: #{tpu_custom_call.1} parent=1 // pred_check_branch
      %48 = sbr.rel (0) target = $region29
    $region28: #{tpu_custom_call.1} parent=1 // pred_region
      _
    $region29: #{tpu_custom_call.1} parent=1 // pred_fallthru
      _
    // Predicated region
    $region30: #{tpu_custom_call.1} parent=1 // pred_check
      _
    $region31: #{tpu_custom_call.1} parent=1 // pred_check_branch
      %50 = sbr.rel (0) target = $region33
    $region32: #{tpu_custom_call.1} parent=1 // pred_region
      _
    $region33: #{tpu_custom_call.1} parent=1 // pred_fallthru
      _
    // Predicated region
    $region34: #{tpu_custom_call.1} parent=1 // pred_check
      _
    $region35: #{tpu_custom_call.1} parent=1 // pred_check_branch
      %52 = sbr.rel (0) target = $region37
    $region36: #{tpu_custom_call.1} parent=1 // pred_region
      _
    $region37: #{tpu_custom_call.1} parent=1 // pred_fallthru
      _
    // Predicated region
    $region38: #{tpu_custom_call.1} parent=1 // pred_check
      _
    $region39: #{tpu_custom_call.1} parent=1 // pred_check_branch
      %54 = sbr.rel (0) target = $region41
    $region40: #{tpu_custom_call.1} parent=1 // pred_region
      %55 = dma.done [#allocation3], 128
    $region41: #{tpu_custom_call.1} parent=1 // pred_fallthru
      _
    // Predicated region
    $region42: #{tpu_custom_call.1} parent=1 // pred_check
      _
    $region43: #{tpu_custom_call.1} parent=1 // pred_check_branch
      %57 = sbr.rel (0) target = $region45
    $region44: #{tpu_custom_call.1} parent=1 // pred_region
      %58 = dma.done [#allocation6], 128
    $region45: #{tpu_custom_call.1} parent=1 // pred_fallthru
      _
    %v60 = vld [vmem:[%s0] sm:$0xff]
    %v61 = vpack.c.bf16 %v60, %v60
    %v62 = vld [vmem:[#allocation2] sm:$0xff]
    %v63 = vpack.c.bf16 %v62, %v62
    %v64 = vld [vmem:[%s2] sm:$0xf]
    %v65 = vld [vmem:[%s2 + $0x4] sm:$0xf]
    %v66 = vld [vmem:[%s2 + $0x8] sm:$0xf]
    %v67 = vld [vmem:[%s2 + $0xc] sm:$0xf]
    %v68 = vld [vmem:[%s3] sm:$0x1]
    %v70 = vlaneseq
    %v71 = vshrl.u32 %v70, 7
    %v72 = vsub.s32 0, %v71
    %v73 = vrot.slane %v68, %v72
    %v79 = vunpack.c.l.b16 %v64
    %v80 = vunpack.c.l.b16 %v65
    %v81 = vunpack.c.l.b16 %v66
    %v82 = vunpack.c.l.b16 %v67
    %v83 = vpack.c.b16 %v80, %v79
    %v84 = vpack.c.b16 %v82, %v81
    %vm87 = vcmask 261120
    %v89 = vsel %vm87, %v61, 0
    %91 = vmatprep.subr.bf16.mxu0 0
    %92 = vmatpush1.bf16.msra.mxu0 %v83
    %93 = vmatprep.subr.bf16.mxu0 0
    %94 = vmatpush1.bf16.msra.mxu0 %v84
    %95 = vmatprep.subr.bf16.mxu0 0
    %96 = vmatpush1.bf16.msra.mxu0 0
    %97 = vmatprep.subr.bf16.mxu0 0
    %98 = vmatpush1.bf16.msra.mxu0 0
    %99 = vmatprep.subr.bf16.mxu0 0
    %100 = vmatpush1.bf16.msra.mxu0 0
    %101 = vmatprep.subr.bf16.mxu0 0
    %102 = vmatpush1.bf16.msra.mxu0 0
    %103 = vmatprep.subr.bf16.mxu0 0
    %104 = vmatpush1.bf16.msra.mxu0 0
    %105 = vmatprep.subr.bf16.mxu0 0
    %106 = vmatpush1.bf16.msra.mxu0 0
    %107 = vmatprep.subr.bf16.mxu0 0
    %108 = vmatpush1.bf16.msra.mxu0 0
    %109 = vmatprep.subr.bf16.mxu0 0
    %110 = vmatpush1.bf16.msra.mxu0 0
    %111 = vmatprep.subr.bf16.mxu0 0
    %112 = vmatpush1.bf16.msra.mxu0 0
    %113 = vmatprep.subr.bf16.mxu0 0
    %114 = vmatpush1.bf16.msra.mxu0 0
    %115 = vmatprep.subr.bf16.mxu0 0
    %116 = vmatpush1.bf16.msra.mxu0 0
    %117 = vmatprep.subr.bf16.mxu0 0
    %118 = vmatpush1.bf16.msra.mxu0 0
    %119 = vmatprep.subr.bf16.mxu0 0
    %120 = vmatpush1.bf16.msra.mxu0 0
    %121 = vmatprep.subr.bf16.mxu0 0
    %122 = vmatpush1.bf16.msra.mxu0 0
    %123 = vmatprep.mubr.bf16.mxu0 0
    %124 = vmatmul.mubr.bf16.gmra.mrb[0].mxu0 %v89
    %v125 = vpop.f32.mrb[0].mxu0
    %v126 = vadd.f32 %v73, %v125
    %v127 = vpop.f32.mrb[0].mxu0
    %v128 = vpop.f32.mrb[0].mxu0
    %v129 = vpop.f32.mrb[0].mxu0
    %130 = vdwg.mxu0
    %v131 = vmax.f32 %v126, 0.0
    %v132 = vpack.c.bf16 %v131, %v131
    %v133 = vld [vmem:[%s4] sm:$0xf]
    %v134 = vld [vmem:[%s4 + $0x4] sm:$0xf]
    %v135 = vld [vmem:[%s4 + $0x8] sm:$0xf]
    %v136 = vld [vmem:[%s4 + $0xc] sm:$0xf]
    %v137 = vld [vmem:[%s4 + $0x10] sm:$0xf]
    %v138 = vld [vmem:[%s4 + $0x14] sm:$0xf]
    %v139 = vld [vmem:[%s4 + $0x18] sm:$0xf]
    %v140 = vld [vmem:[%s4 + $0x1c] sm:$0xf]
    %v141 = vld [vmem:[#allocation5] sm:$0xf]
    %v142 = vld [vmem:[#allocation5 + $0x4] sm:$0xf]
    %v145 = vunpack.c.l.b16 %v141
    %v146 = vunpack.c.l.b16 %v142
    %v147 = vpack.c.b16 %v146, %v145
    %vm149 = vcmask 130048
    %v151 = vsel %vm149, %v63, 0
    %153 = vmatprep.subr.bf16.mxu0 0
    %154 = vmatpush1.bf16.msra.mxu0 %v147
    %155 = vmatprep.subr.bf16.mxu0 0
    %156 = vmatpush1.bf16.msra.mxu0 0
    %157 = vmatprep.subr.bf16.mxu0 0
    %158 = vmatpush1.bf16.msra.mxu0 0
    %159 = vmatprep.subr.bf16.mxu0 0
    %160 = vmatpush1.bf16.msra.mxu0 0
    %161 = vmatprep.subr.bf16.mxu0 0
    %162 = vmatpush1.bf16.msra.mxu0 0
    %163 = vmatprep.subr.bf16.mxu0 0
    %164 = vmatpush1.bf16.msra.mxu0 0
    %165 = vmatprep.subr.bf16.mxu0 0
    %166 = vmatpush1.bf16.msra.mxu0 0
    %167 = vmatprep.subr.bf16.mxu0 0
    %168 = vmatpush1.bf16.msra.mxu0 0
    %169 = vmatprep.subr.bf16.mxu0 0
    %170 = vmatpush1.bf16.msra.mxu0 0
    %171 = vmatprep.subr.bf16.mxu0 0
    %172 = vmatpush1.bf16.msra.mxu0 0
    %173 = vmatprep.subr.bf16.mxu0 0
    %174 = vmatpush1.bf16.msra.mxu0 0
    %175 = vmatprep.subr.bf16.mxu0 0
    %176 = vmatpush1.bf16.msra.mxu0 0
    %177 = vmatprep.subr.bf16.mxu0 0
    %178 = vmatpush1.bf16.msra.mxu0 0
    %179 = vmatprep.subr.bf16.mxu0 0
    %180 = vmatpush1.bf16.msra.mxu0 0
    %181 = vmatprep.subr.bf16.mxu0 0
    %182 = vmatpush1.bf16.msra.mxu0 0
    %183 = vmatprep.subr.bf16.mxu0 0
    %184 = vmatpush1.bf16.msra.mxu0 0
    %185 = vmatprep.mubr.bf16.mxu0 0
    %186 = vmatmul.mubr.bf16.gmra.mrb[0].mxu0 %v151
    %v187 = vpop.f32.mrb[0].mxu0
    %v188 = vadd.f32 0.0, %v187
    %v189 = vpop.f32.mrb[0].mxu0
    %v190 = vpop.f32.mrb[0].mxu0
    %v191 = vpop.f32.mrb[0].mxu0
    %192 = vdwg.mxu0
    %v201 = vunpack.c.l.b16 %v133
    %v202 = vunpack.c.l.b16 %v134
    %v203 = vunpack.c.l.b16 %v135
    %v204 = vunpack.c.l.b16 %v136
    %v205 = vunpack.c.l.b16 %v137
    %v206 = vunpack.c.l.b16 %v138
    %v207 = vunpack.c.l.b16 %v139
    %v208 = vunpack.c.l.b16 %v140
    %v209 = vpack.c.b16 %v202, %v201
    %v210 = vpack.c.b16 %v204, %v203
    %v211 = vpack.c.b16 %v206, %v205
    %v212 = vpack.c.b16 %v208, %v207
    %vm217 = vcmask 523264
    %v219 = vsel %vm217, %v132, 0
    %221 = vmatprep.subr.bf16.mxu0 0
    %222 = vmatpush1.bf16.msra.mxu0 %v209
    %223 = vmatprep.subr.bf16.mxu0 0
    %224 = vmatpush1.bf16.msra.mxu0 %v210
    %225 = vmatprep.subr.bf16.mxu0 0
    %226 = vmatpush1.bf16.msra.mxu0 %v211
    %227 = vmatprep.subr.bf16.mxu0 0
    %228 = vmatpush1.bf16.msra.mxu0 %v212
    %229 = vmatprep.subr.bf16.mxu0 0
    %230 = vmatpush1.bf16.msra.mxu0 0
    %231 = vmatprep.subr.bf16.mxu0 0
    %232 = vmatpush1.bf16.msra.mxu0 0
    %233 = vmatprep.subr.bf16.mxu0 0
    %234 = vmatpush1.bf16.msra.mxu0 0
    %235 = vmatprep.subr.bf16.mxu0 0
    %236 = vmatpush1.bf16.msra.mxu0 0
    %237 = vmatprep.subr.bf16.mxu0 0
    %238 = vmatpush1.bf16.msra.mxu0 0
    %239 = vmatprep.subr.bf16.mxu0 0
    %240 = vmatpush1.bf16.msra.mxu0 0
    %241 = vmatprep.subr.bf16.mxu0 0
    %242 = vmatpush1.bf16.msra.mxu0 0
    %243 = vmatprep.subr.bf16.mxu0 0
    %244 = vmatpush1.bf16.msra.mxu0 0
    %245 = vmatprep.subr.bf16.mxu0 0
    %246 = vmatpush1.bf16.msra.mxu0 0
    %247 = vmatprep.subr.bf16.mxu0 0
    %248 = vmatpush1.bf16.msra.mxu0 0
    %249 = vmatprep.subr.bf16.mxu0 0
    %250 = vmatpush1.bf16.msra.mxu0 0
    %251 = vmatprep.subr.bf16.mxu0 0
    %252 = vmatpush1.bf16.msra.mxu0 0
    %253 = vmatprep.mubr.bf16.mxu0 0
    %254 = vmatmul.mubr.bf16.gmra.mrb[0].mxu0 %v219
    %v255 = vpop.f32.mrb[0].mxu0
    %v256 = vadd.f32 %v188, %v255
    %v257 = vpop.f32.mrb[0].mxu0
    %v258 = vpop.f32.mrb[0].mxu0
    %v259 = vpop.f32.mrb[0].mxu0
    %260 = vdwg.mxu0
    %v261 = vld [vmem:[%s6] sm:$0x1]
    %v263 = vlaneseq
    %v264 = vshrl.u32 %v263, 7
    %v265 = vsub.s32 0, %v264
    %v266 = vrot.slane %v261, %v265
    %v268 = vadd.f32 %v256, %v266
    %v269 = vmax.f32 %v268, 0.0
    %v270 = vpack.c.bf16 %v269, %v269
    %v271 = vld [vmem:[%s7] sm:$0xf]
    %v272 = vld [vmem:[%s7 + $0x4] sm:$0xf]
    %v273 = vld [vmem:[%s7 + $0x8] sm:$0xf]
    %v274 = vld [vmem:[%s7 + $0xc] sm:$0xf]
    %v275 = vld [vmem:[%s7 + $0x10] sm:$0xf]
    %v276 = vld [vmem:[%s7 + $0x14] sm:$0xf]
    %v277 = vld [vmem:[%s7 + $0x18] sm:$0xf]
    %v278 = vld [vmem:[%s7 + $0x1c] sm:$0xf]
    %v279 = vld [vmem:[%s8] sm:$0x1]
    %v281 = vlaneseq
    %v282 = vshrl.u32 %v281, 7
    %v283 = vsub.s32 0, %v282
    %v284 = vrot.slane %v279, %v283
    %v294 = vunpack.c.l.b16 %v271
    %v295 = vunpack.c.l.b16 %v272
    %v296 = vunpack.c.l.b16 %v273
    %v297 = vunpack.c.l.b16 %v274
    %v298 = vunpack.c.l.b16 %v275
    %v299 = vunpack.c.l.b16 %v276
    %v300 = vunpack.c.l.b16 %v277
    %v301 = vunpack.c.l.b16 %v278
    %v302 = vpack.c.b16 %v295, %v294
    %v303 = vpack.c.b16 %v297, %v296
    %v304 = vpack.c.b16 %v299, %v298
    %v305 = vpack.c.b16 %v301, %v300
    %v311 = vsel %vm217, %v270, 0
    %313 = vmatprep.subr.bf16.mxu0 0
    %314 = vmatpush1.bf16.msra.mxu0 %v302
    %315 = vmatprep.subr.bf16.mxu0 0
    %316 = vmatpush1.bf16.msra.mxu0 %v303
    %317 = vmatprep.subr.bf16.mxu0 0
    %318 = vmatpush1.bf16.msra.mxu0 %v304
    %319 = vmatprep.subr.bf16.mxu0 0
    %320 = vmatpush1.bf16.msra.mxu0 %v305
    %321 = vmatprep.subr.bf16.mxu0 0
    %322 = vmatpush1.bf16.msra.mxu0 0
    %323 = vmatprep.subr.bf16.mxu0 0
    %324 = vmatpush1.bf16.msra.mxu0 0
    %325 = vmatprep.subr.bf16.mxu0 0
    %326 = vmatpush1.bf16.msra.mxu0 0
    %327 = vmatprep.subr.bf16.mxu0 0
    %328 = vmatpush1.bf16.msra.mxu0 0
    %329 = vmatprep.subr.bf16.mxu0 0
    %330 = vmatpush1.bf16.msra.mxu0 0
    %331 = vmatprep.subr.bf16.mxu0 0
    %332 = vmatpush1.bf16.msra.mxu0 0
    %333 = vmatprep.subr.bf16.mxu0 0
    %334 = vmatpush1.bf16.msra.mxu0 0
    %335 = vmatprep.subr.bf16.mxu0 0
    %336 = vmatpush1.bf16.msra.mxu0 0
    %337 = vmatprep.subr.bf16.mxu0 0
    %338 = vmatpush1.bf16.msra.mxu0 0
    %339 = vmatprep.subr.bf16.mxu0 0
    %340 = vmatpush1.bf16.msra.mxu0 0
    %341 = vmatprep.subr.bf16.mxu0 0
    %342 = vmatpush1.bf16.msra.mxu0 0
    %343 = vmatprep.subr.bf16.mxu0 0
    %344 = vmatpush1.bf16.msra.mxu0 0
    %345 = vmatprep.mubr.bf16.mxu0 0
    %346 = vmatmul.mubr.bf16.gmra.mrb[0].mxu0 %v311
    %v347 = vpop.f32.mrb[0].mxu0
    %v348 = vadd.f32 %v284, %v347
    %v349 = vpop.f32.mrb[0].mxu0
    %v350 = vpop.f32.mrb[0].mxu0
    %v351 = vpop.f32.mrb[0].mxu0
    %352 = vdwg.mxu0
    %v353 = vsel %vm87, %v348, -inf
    %354 = vmax.xlane.f32.xlu0 %v353
    %v355 = vpop.xlane.xlu0 %354
    %v356 = vsub.f32 %v348, %v355
    %v357 = vmul.f32 %v356, 1.442695
    %v358 = vpow.pop %v357
    %v359 = vsel %vm87, %v358, 0.0
    %360 = vadd.xlane.f32.xlu0 %v359
    %v361 = vpop.xlane.xlu0 %360
    %v362 = vrcp.pop %v361
    %v363 = vmul.f32 %v358, %v362
    %364 = vst.msk [vmem:[#allocation7] sm:$0xff] %vm87, %v363
    // Predicated region
    $region46: #{tpu_custom_call.1} parent=1 // pred_check
      _
    $region47: #{tpu_custom_call.1} parent=1 // pred_check_branch
      %366 = sbr.rel (0) target = $region49
    $region48: #{tpu_custom_call.1} parent=1 // pred_region
      %s368 = ssub.s32 128, 128
      %369 = vsyncadd [#allocation4], %s368
      %s371 = sshll.u32 [#allocation7], 4
      %s372 = int_to_ptr.vmem [resolvable:$true] %s371
      %374 = dma.vmem_to_hbm [thread:$0]  %s372, 128, %s9, [#allocation4]
    $region49: #{tpu_custom_call.1} parent=1 // pred_fallthru
      _
    // Predicated region
    $region50: #{tpu_custom_call.1} parent=1 // pred_check
      _
    $region51: #{tpu_custom_call.1} parent=1 // pred_check_branch
      %376 = sbr.rel (0) target = $region53
    $region52: #{tpu_custom_call.1} parent=1 // pred_region
      %377 = dma.done [#allocation4], 128
    $region53: #{tpu_custom_call.1} parent=1 // pred_fallthru
      _
    %378 = vsyncpa [#allocation3], 1
    %379 = vsyncpa [#allocation6], 1
    %380 = vsyncpa [#allocation4], 1

</llo_original>
